<compile_context>
chip_gen: v5e
topology: v5e:2x2
jax: 0.10.0
libtpu: 0.0.40
codegen_flags: <defaults>
</compile_context>

<pallas_src>
import functools

import jax
import jax.numpy as jnp
from jax import lax
from jax.experimental import pallas as pl
from jax.experimental.pallas import tpu as pltpu


def _round_up(n, m):
    return ((n + m - 1) // m) * m


def _db_item_emb_kernel(x2_ref, table_ref, out_ref, *, vy, va, vtot_pad):
    # x2_ref    : (TB, 3) int32, columns = (author_idx, publisher_idx, year_idx)
    # table_ref : (VTOT_PAD, OUT_PAD) f32 block-diagonal packed table (resident)
    # out_ref   : (TB, OUT_PAD) f32 = [year_emb | author_emb | publisher_emb | 0-pad]
    idx = x2_ref[...]                       # (TB, 3)
    author = idx[:, 0:1]                    # (TB, 1)
    publisher = idx[:, 1:2]
    year = idx[:, 2:3]

    # Offsets into the stacked (padded) vocabulary.
    rows_year = year                        # [0, vy)
    rows_author = author + vy               # [vy, vy+va)
    rows_pub = publisher + (vy + va)        # [vy+va, vtot)  (< vtot_pad)

    tb = idx.shape[0]
    lane = lax.broadcasted_iota(jnp.int32, (tb, vtot_pad), 1)
    # One row with three ones -> lookup + concat in a single MXU matmul.
    onehot = ((lane == rows_year) | (lane == rows_author) | (lane == rows_pub))
    onehot = onehot.astype(jnp.float32)

    out_ref[...] = jnp.dot(
        onehot, table_ref[...], preferred_element_type=jnp.float32
    ).astype(out_ref.dtype)


def pack_tables(emb_year, emb_author, emb_publisher, *, lane_multiple=128):
    """Packs the three (V_i, D) tables into a block-diagonal, lane-padded array.

    Returns an array of shape (round_up(Vy+Va+Vp, 128), round_up(3*D, 128)).
    """
    vy, d = emb_year.shape
    va, _ = emb_author.shape
    vp, _ = emb_publisher.shape
    vtot = vy + va + vp
    vtot_pad = _round_up(vtot, lane_multiple)
    out_dim_pad = _round_up(3 * d, lane_multiple)

    packed = jnp.zeros((vtot_pad, out_dim_pad), dtype=jnp.float32)
    packed = packed.at[:vy, 0:d].set(emb_year.astype(jnp.float32))
    packed = packed.at[vy:vy + va, d:2 * d].set(emb_author.astype(jnp.float32))
    packed = packed.at[vy + va:vtot, 2 * d:3 * d].set(
        emb_publisher.astype(jnp.float32))
    return packed


def db_item_emb_forward(x2, packed_table, *, n_year, n_author, n_publisher,
                        emb_dim, tile_b=None):
    """Pallas forward: x2 (B,3) int -> (B, 3*emb_dim) f32 concat embeddings."""
    B = x2.shape[0]
    vtot = n_year + n_author + n_publisher
    out_dim = 3 * emb_dim
    vtot_pad, out_dim_pad = packed_table.shape
    assert vtot_pad >= vtot and out_dim_pad >= out_dim

    x2 = x2.astype(jnp.int32)

    # Batch tile: multiple of 8 sublanes, capped so tiles stay well inside the
    # v7x 64 MiB VMEM budget even with double buffering.
    if tile_b is None:
        tile_b = min(max(B, 8), 512)
    tile_b = max(8, ((tile_b + 7) // 8) * 8)

    b_pad = pl.cdiv(B, tile_b) * tile_b
    if b_pad != B:
        x2 = jnp.pad(x2, ((0, b_pad - B), (0, 0)))  # index-0 pads are valid rows

    grid = (b_pad // tile_b,)

    kernel = functools.partial(
        _db_item_emb_kernel, vy=n_year, va=n_author, vtot_pad=vtot_pad)

    flops = 2 * b_pad * vtot_pad * out_dim_pad
    bytes_accessed = (b_pad * 3 * 4                      # indices
                      + vtot_pad * out_dim_pad * 4       # packed table
                      + b_pad * out_dim_pad * 4)         # output

    out = pl.pallas_call(
        kernel,
        out_shape=jax.ShapeDtypeStruct((b_pad, out_dim_pad), jnp.float32),
        grid=grid,
        in_specs=[
            pl.BlockSpec((tile_b, 3), lambda i: (i, 0)),             # batch-tiled indices
            pl.BlockSpec((vtot_pad, out_dim_pad), lambda i: (0, 0)),  # table resident in VMEM
        ],
        out_specs=pl.BlockSpec((tile_b, out_dim_pad), lambda i: (i, 0)),
        compiler_params=pltpu.CompilerParams(
            dimension_semantics=("parallel",)),
        cost_estimate=pl.CostEstimate(
            flops=flops, transcendentals=0, bytes_accessed=bytes_accessed),
    )(x2, packed_table)

    return out[:B, :out_dim]


def _reference_forward(x2, emb_year, emb_author, emb_publisher):
    author_idx, publisher_idx, year_idx = x2[:, 0], x2[:, 1], x2[:, 2]
    return jnp.concatenate(
        [emb_year[year_idx], emb_author[author_idx], emb_publisher[publisher_idx]],
        axis=1)


if __name__ == "__main__":
    D = 32
    config = {"n_year_db": 16, "n_author_db": 64, "n_publisher_db": 48}
    B = 8

    key = jax.random.PRNGKey(0)
    k_y, k_a, k_p, k_ia, k_ip, k_iy = jax.random.split(key, 6)

    emb_year = jax.random.normal(k_y, (config["n_year_db"], D), jnp.float32)
    emb_author = jax.random.normal(k_a, (config["n_author_db"], D), jnp.float32)
    emb_publisher = jax.random.normal(k_p, (config["n_publisher_db"], D), jnp.float32)

    author_idx = jax.random.randint(k_ia, (B,), 0, config["n_author_db"], jnp.int32)
    publisher_idx = jax.random.randint(k_ip, (B,), 0, config["n_publisher_db"], jnp.int32)
    year_idx = jax.random.randint(k_iy, (B,), 0, config["n_year_db"], jnp.int32)
    x2 = jnp.stack([author_idx, publisher_idx, year_idx], axis=1)  # (B, 3)

    packed = pack_tables(emb_year, emb_author, emb_publisher)

    out = db_item_emb_forward(
        x2, packed,
        n_year=config["n_year_db"],
        n_author=config["n_author_db"],
        n_publisher=config["n_publisher_db"],
        emb_dim=D)
    out = jax.block_until_ready(out)

    ref = _reference_forward(x2, emb_year, emb_author, emb_publisher)
    assert out.shape == (B, 3 * D), out.shape
    assert jnp.allclose(out, ref, atol=1e-6, rtol=1e-6)
    print("KERNEL_OK")
</pallas_src>

<mosaic_0001>
module attributes {stable_mosaic.version = 11 : i64} {
  func.func @_db_item_emb_kernel(%arg0: i32, %arg1: memref<8x3xi32, #tpu.memory_space<vmem>>, %arg2: memref<128x128xf32, #tpu.memory_space<vmem>>, %arg3: memref<8x128xf32, #tpu.memory_space<vmem>>) attributes {dimension_semantics = [#tpu.dimension_semantics<parallel>], iteration_bounds = array<i64: 1>, scalar_prefetch = 0 : i64, scratch_operands = 0 : i64, tpu.core_type = #tpu.core_type<tc>, window_params = [{transform_indices = @transform_0, window_bounds = array<i64: 8, 3>}, {pipeline_mode = #tpu.pipeline_mode<synchronous>, transform_indices = @transform_1, window_bounds = array<i64: 128, 128>}, {transform_indices = @transform_2, window_bounds = array<i64: 8, 128>}]} {
    %c0 = arith.constant 0 : index
    %c0_0 = arith.constant 0 : index
    %0 = vector.load %arg1[%c0, %c0_0] : memref<8x3xi32, #tpu.memory_space<vmem>>, vector<8x3xi32>
    %1 = vector.extract_strided_slice %0 {offsets = [0, 0], sizes = [8, 1], strides = [1, 1]} : vector<8x3xi32> to vector<8x1xi32>
    %2 = vector.extract_strided_slice %0 {offsets = [0, 1], sizes = [8, 1], strides = [1, 1]} : vector<8x3xi32> to vector<8x1xi32>
    %3 = vector.extract_strided_slice %0 {offsets = [0, 2], sizes = [8, 1], strides = [1, 1]} : vector<8x3xi32> to vector<8x1xi32>
    %c16_i32 = arith.constant 16 : i32
    %4 = vector.broadcast %c16_i32 : i32 to vector<8x1xi32>
    %5 = arith.addi %1, %4 : vector<8x1xi32>
    %c80_i32 = arith.constant 80 : i32
    %6 = vector.broadcast %c80_i32 : i32 to vector<8x1xi32>
    %7 = arith.addi %2, %6 : vector<8x1xi32>
    %8 = tpu.iota {dimensions = array<i32: 1>} : vector<8x128xi32>
    %9 = vector.broadcast %3 : vector<8x1xi32> to vector<8x128xi32>
    %10 = arith.cmpi eq, %8, %9 : vector<8x128xi32>
    %11 = vector.broadcast %5 : vector<8x1xi32> to vector<8x128xi32>
    %12 = arith.cmpi eq, %8, %11 : vector<8x128xi32>
    %13 = arith.ori %10, %12 : vector<8x128xi1>
    %14 = vector.broadcast %7 : vector<8x1xi32> to vector<8x128xi32>
    %15 = arith.cmpi eq, %8, %14 : vector<8x128xi32>
    %16 = arith.ori %13, %15 : vector<8x128xi1>
    %17 = arith.extui %16 : vector<8x128xi1> to vector<8x128xi32>
    %18 = arith.sitofp %17 : vector<8x128xi32> to vector<8x128xf32>
    %c0_1 = arith.constant 0 : index
    %c0_2 = arith.constant 0 : index
    %19 = vector.load %arg2[%c0_1, %c0_2] : memref<128x128xf32, #tpu.memory_space<vmem>>, vector<128x128xf32>
    %cst = arith.constant dense<0.000000e+00> : vector<8x128xf32>
    %20 = tpu.matmul %18, %19, %cst {dimension_numbers = #tpu.dot_dimension_numbers<[1], [0], [0], [1], [0, 0, 1, 1], [], []>} : vector<8x128xf32>, vector<128x128xf32>, vector<8x128xf32> -> vector<8x128xf32>
    %c0_3 = arith.constant 0 : index
    %c0_4 = arith.constant 0 : index
    %21 = vector.load %arg3[%c0_3, %c0_4] : memref<8x128xf32, #tpu.memory_space<vmem>>, vector<8x128xf32>
    tpu.vector_store %arg3[%c0_3, %c0_4], %20 {strides = array<i32>} : memref<8x128xf32, #tpu.memory_space<vmem>>, vector<8x128xf32>,
    return
  }
  func.func @transform_0(%arg0: i32) -> (i32, i32) {
    %c0_i32 = arith.constant 0 : i32
    %c0_i32_0 = arith.constant 0 : i32
    return %arg0, %c0_i32 : i32, i32
  }
  func.func @transform_1(%arg0: i32) -> (i32, i32) {
    %c0_i32 = arith.constant 0 : i32
    %c0_i32_0 = arith.constant 0 : i32
    %c0_i32_1 = arith.constant 0 : i32
    return %c0_i32, %c0_i32_0 : i32, i32
  }
  func.func @transform_2(%arg0: i32) -> (i32, i32) {
    %c0_i32 = arith.constant 0 : i32
    %c0_i32_0 = arith.constant 0 : i32
    return %arg0, %c0_i32 : i32, i32
  }
}

</mosaic_0001>

<llo_original>
// kernel: tpu_custom_call.1
$region0: #{tpu_custom_call.1}
  #allocation0 [shape = 'u32[]', space=smem, size = 0x4, offset = 0x4, fixed_abs, tag = 'smem constant byte address 0x4 - core index']
  #allocation1 [shape = 'u32[72,128]{1,0:T(1,128)}', space=vmem, size = 0x9000, scoped, tag = 'internal scratch']
  %s0 = inlined_call_operand.vmem [shape: s32[8,3], index: 0, kind: input, shape index: {}]
  %s1 = inlined_call_operand.hbm [shape: f32[128,128], index: 1, kind: input, shape index: {}]
  %s2 = inlined_call_operand.hbm [shape: f32[8,128], index: 2, kind: output, shape index: {}]
  %s3 = sld [smem:[#allocation0]]
  $region22: #{tpu_custom_call.1} parent=0
    _
  %s5 = ssub.s32 1, %s3
  %s6 = scalar_select 0, %s5, %s3
  $region1: #{tpu_custom_call.1} parent=0
    #allocation2 [shape = 'u8[65536]{0}', space=vmem, size = 0x10000, scoped, tag = 'input window, operand 1, single buffered']
    #allocation3 [shape = 's32[1]{0}', space=sflag, size = 0x4, scoped, tag = 'scoped memory for tpu_custom_call.1']
    #allocation4 [shape = 's32[1]{0}', space=sflag, size = 0x4, scoped, tag = 'scoped memory for tpu_custom_call.1']
    #allocation5 [shape = 'u8[4096]{0}', space=vmem, size = 0x1000, scoped, tag = 'output window, operand 0, single buffered']
    %7 = vsyncpa [#allocation3], 0
    %8 = vsyncpa [#allocation4], 0
    // Predicated region
    $region2: #{tpu_custom_call.1} parent=1 // pred_check
      _
    $region3: #{tpu_custom_call.1} parent=1 // pred_check_branch
      %10 = sbr.rel (0) target = $region5
    $region4: #{tpu_custom_call.1} parent=1 // pred_region
      _
    $region5: #{tpu_custom_call.1} parent=1 // pred_fallthru
      _
    // Predicated region
    $region6: #{tpu_custom_call.1} parent=1 // pred_check
      _
    $region7: #{tpu_custom_call.1} parent=1 // pred_check_branch
      %12 = sbr.rel (0) target = $region9
    $region8: #{tpu_custom_call.1} parent=1 // pred_region
      %14 = vsyncadd [#allocation3], 0
      %s15 = sshll.u32 %s1, 4
      %s16 = int_to_ptr.hbm [resolvable:$true] %s15
      %s17 = sshll.u32 [#allocation2], 4
      %s18 = int_to_ptr.vmem [resolvable:$true] %s17
      %23 = dma.hbm_to_vmem [thread:$0]  %s16, 2048, %s18, [#allocation3], 128, 128, 8
    $region9: #{tpu_custom_call.1} parent=1 // pred_fallthru
      _
    // Predicated region
    $region10: #{tpu_custom_call.1} parent=1 // pred_check
      _
    $region11: #{tpu_custom_call.1} parent=1 // pred_check_branch
      %25 = sbr.rel (0) target = $region13
    $region12: #{tpu_custom_call.1} parent=1 // pred_region
      %27 = dma.done [#allocation3], 2048
    $region13: #{tpu_custom_call.1} parent=1 // pred_fallthru
      _
    %v28 = vld [vmem:[%s0] sm:$0xff]
    %v29 = vadd.s32 %v28, 16
    %v30 = vadd.s32 %v28, 80
    %v31 = vlaneseq
    %v32 = vand.u32 %v31, 127
    %33 = vset.pattern.permute.xlu0 2
    %34 = vperm.xlu0 %33, %v28
    %v35 = vpop.permute.xlu0 %34
    %vm36 = vcmp.eq.s32.totalorder %v32, %v35
    %37 = vset.pattern.permute.xlu0 0
    %38 = vperm.xlu0 %37, %v29
    %v39 = vpop.permute.xlu0 %38
    %vm40 = vcmp.eq.s32.totalorder %v32, %v39
    %vm41 = vmor %vm36, %vm40
    %42 = vset.pattern.permute.xlu0 1
    %43 = vperm.xlu0 %42, %v30
    %v44 = vpop.permute.xlu0 %43
    %vm45 = vcmp.eq.s32.totalorder %v32, %v44
    %vm46 = vmor %vm41, %vm45
    %v47 = vsel %vm46, 1, 0
    %v48 = vcvt.s32.f32 %v47
    %v49 = vld [vmem:[#allocation2] sm:$0xff]
    %v50 = vld [vmem:[#allocation2 + $0x8] sm:$0xff]
    %v51 = vld [vmem:[#allocation2 + $0x10] sm:$0xff]
    %v52 = vld [vmem:[#allocation2 + $0x18] sm:$0xff]
    %v53 = vld [vmem:[#allocation2 + $0x20] sm:$0xff]
    %v54 = vld [vmem:[#allocation2 + $0x28] sm:$0xff]
    %v55 = vld [vmem:[#allocation2 + $0x30] sm:$0xff]
    %v56 = vld [vmem:[#allocation2 + $0x38] sm:$0xff]
    %v57 = vld [vmem:[#allocation2 + $0x40] sm:$0xff]
    %v58 = vld [vmem:[#allocation2 + $0x48] sm:$0xff]
    %v59 = vld [vmem:[#allocation2 + $0x50] sm:$0xff]
    %v60 = vld [vmem:[#allocation2 + $0x58] sm:$0xff]
    %v61 = vld [vmem:[#allocation2 + $0x60] sm:$0xff]
    %v62 = vld [vmem:[#allocation2 + $0x68] sm:$0xff]
    %v63 = vld [vmem:[#allocation2 + $0x70] sm:$0xff]
    %v64 = vld [vmem:[#allocation2 + $0x78] sm:$0xff]
    %65 = vmatpush.msra.mxu0 %v64
    %66 = vmatpush.msra.mxu0 %v63
    %67 = vmatpush.msra.mxu0 %v62
    %68 = vmatpush.msra.mxu0 %v61
    %69 = vmatpush.msra.mxu0 %v60
    %70 = vmatpush.msra.mxu0 %v59
    %71 = vmatpush.msra.mxu0 %v58
    %72 = vmatpush.msra.mxu0 %v57
    %73 = vmatpush.msra.mxu0 %v56
    %74 = vmatpush.msra.mxu0 %v55
    %75 = vmatpush.msra.mxu0 %v54
    %76 = vmatpush.msra.mxu0 %v53
    %77 = vmatpush.msra.mxu0 %v52
    %78 = vmatpush.msra.mxu0 %v51
    %79 = vmatpush.msra.mxu0 %v50
    %80 = vmatpush.msra.mxu0 %v49
    %81 = vmatmul.f32.gmra.mxu0 %v48
    %v82 = vpop.f32.mrf.mxu0
    %v83 = vadd.f32 0.0, %v82
    %84 = vdwg.mxu0
    %85 = vst [vmem:[#allocation5] sm:$0xff] %v83
    // Predicated region
    $region14: #{tpu_custom_call.1} parent=1 // pred_check
      _
    $region15: #{tpu_custom_call.1} parent=1 // pred_check_branch
      %87 = sbr.rel (0) target = $region17
    $region16: #{tpu_custom_call.1} parent=1 // pred_region
      %89 = vsyncadd [#allocation4], 0
      %s91 = sshll.u32 [#allocation5], 4
      %s92 = int_to_ptr.vmem [resolvable:$true] %s91
      %s93 = sshll.u32 %s2, 4
      %s94 = int_to_ptr.hbm [resolvable:$true] %s93
      %96 = dma.vmem_to_hbm [thread:$0]  %s92, 128, %s94, [#allocation4]
    $region17: #{tpu_custom_call.1} parent=1 // pred_fallthru
      _
    // Predicated region
    $region18: #{tpu_custom_call.1} parent=1 // pred_check
      _
    $region19: #{tpu_custom_call.1} parent=1 // pred_check_branch
      %98 = sbr.rel (0) target = $region21
    $region20: #{tpu_custom_call.1} parent=1 // pred_region
      %100 = dma.done [#allocation4], 128
    $region21: #{tpu_custom_call.1} parent=1 // pred_fallthru
      _
    %101 = vsyncpa [#allocation3], 1
    %102 = vsyncpa [#allocation4], 1

</llo_original>
